<compile_context>
chip_gen: v7x
topology: tpu7x:2x2x1
jax: 0.10.0
libtpu: 0.0.40
codegen_flags: <defaults>
</compile_context>

<pallas_src>
import functools

import jax
import jax.numpy as jnp
from jax.experimental import pallas as pl
from jax.experimental.pallas import tpu as pltpu

BINS = 10
ALPHA = 0.75


def _ghm_hist_kernel(x_ref, t_ref, cnt_ref, s_ref, *, bins, n_elems):
    """Streaming per-block pass: accumulate cumulative (>= threshold) bin stats.

    cnt_ref[i] accumulates |{e : gs_e >= i}|  (i = 1..bins-1; slot 0 = N).
    s_ref[i]   accumulates sum of bce over {e : gs_e >= i}  (slot 0 = total).
    Both live in SMEM and persist across grid steps (constant block index).
    """
    step = pl.program_id(0)

    @pl.when(step == 0)
    def _init():
        cnt_ref[0] = jnp.int32(n_elems)          # every element has gs >= 0
        s_ref[0] = jnp.float32(0.0)
        for i in range(1, bins):
            cnt_ref[i] = jnp.int32(0)
            s_ref[i] = jnp.float32(0.0)

    # Upcast in-kernel (inputs may be bf16 in HBM).
    x = x_ref[...].astype(jnp.float32)
    t = t_ref[...].astype(jnp.float32)

    # Shared transcendental work: exp(-|x|) feeds both the stable sigmoid and
    # the BCE-with-logits log term (EUP: exp + reciprocal + log1p).
    e = jnp.exp(-jnp.abs(x))
    inv_1pe = pl.reciprocal(1.0 + e, approx=False)   # exact: bin-edge parity w/ reference
    sig = jnp.where(x >= 0.0, inv_1pe, e * inv_1pe)  # == sigmoid(x)
    bce = jnp.maximum(x, 0.0) - x * t + jnp.log1p(e)  # unweighted BCE-with-logits
    gs = jnp.abs(sig - t) * jnp.float32(bins - 0.0001)

    # Cumulative bce sum (threshold 0 is all-true).
    s_ref[0] = s_ref[0] + jnp.sum(bce)
    # Monotone threshold masks: one compare per bin; counts in int32 so the
    # histogram stays exact well past 2^24 elements per bin.
    for i in range(1, bins):
        ge = gs >= jnp.float32(i)
        cnt_ref[i] = cnt_ref[i] + jnp.sum(ge.astype(jnp.int32))
        s_ref[i] = s_ref[i] + jnp.sum(jnp.where(ge, bce, 0.0))


@functools.lru_cache(maxsize=None)
def _build_call(bins, rows, cols, block_rows):
    """Construct the pallas_call exactly once per (bins, shape, block)."""
    kernel = functools.partial(_ghm_hist_kernel, bins=bins, n_elems=rows * cols)
    grid = (rows // block_rows,)
    return pl.pallas_call(
        kernel,
        out_shape=(
            jax.ShapeDtypeStruct((bins,), jnp.int32),    # cumulative counts
            jax.ShapeDtypeStruct((bins,), jnp.float32),  # cumulative bce sums
        ),
        grid=grid,
        in_specs=[
            pl.BlockSpec((block_rows, cols), lambda i: (i, 0)),   # x
            pl.BlockSpec((block_rows, cols), lambda i: (i, 0)),   # target
        ],
        out_specs=(
            pl.BlockSpec((bins,), lambda i: (0,),
                         memory_space=pltpu.MemorySpace.SMEM),
            pl.BlockSpec((bins,), lambda i: (0,),
                         memory_space=pltpu.MemorySpace.SMEM),
        ),
        compiler_params=pltpu.CompilerParams(
            dimension_semantics=("arbitrary",)),   # sequential reduction axis
    )


def _pick_block_rows(rows, cols, itemsize):
    """Largest row block that divides `rows`, is sublane-aligned, and keeps a
    double-buffered (x, t) pair comfortably inside default scoped VMEM."""
    align = {4: 8, 2: 16, 1: 32}.get(itemsize, 8)
    cap_rows = max(align, (2 * 1024 * 1024) // max(cols * itemsize, 1))
    if rows <= cap_rows or rows % align != 0:
        return rows                       # single full-array block (always legal)
    br = (cap_rows // align) * align
    while br > align and rows % br != 0:
        br -= align
    return br if (br >= align and rows % br == 0) else rows


@functools.partial(jax.jit, static_argnames=("bins", "block_rows"))
def ghm_forward(x, target, last_bin_count, alpha_eff, *, bins, block_rows=None):
    """Pure functional forward: returns (loss, new_bin_count)."""
    rows, cols = x.shape
    if block_rows is None:
        block_rows = _pick_block_rows(rows, cols, x.dtype.itemsize)
    assert rows % block_rows == 0, "block_rows must divide the row count"

    cnt_cum, s_cum = _build_call(bins, rows, cols, block_rows)(x, target)

    # Tiny (bins,)-sized finalize: EMA, nonempty, clamp, beta, dot.
    n = jnp.float32(rows * cols)
    zero = jnp.zeros((1,), jnp.float32)
    cnt_cum = jnp.concatenate([cnt_cum.astype(jnp.float32), zero])   # (bins+1,)
    s_cum = jnp.concatenate([s_cum, zero])                           # (bins+1,)
    counts = cnt_cum[:-1] - cnt_cum[1:]        # per-bin populations
    svals = s_cum[:-1] - s_cum[1:]             # per-bin bce sums
    new_counts = alpha_eff * last_bin_count + (1.0 - alpha_eff) * counts
    nonempty = jnp.sum((new_counts > 0.0).astype(jnp.float32))
    gd = jnp.maximum(new_counts * nonempty, 0.0001)
    beta = n / gd
    loss = jnp.sum(beta * svals) / n
    return loss, new_counts


class GHMCLossPallas:
    """Thin stateful wrapper mirroring GHM_Loss (GHMC flavor) forward semantics.

    The heavy lifting is the jitted, pure `ghm_forward`; the EMA bin-count
    state is threaded functionally and merely cached on this object.
    """

    def __init__(self, bins, alpha):
        self._bins = int(bins)
        self._alpha = float(alpha)
        self._last_bin_count = None          # (bins,) f32, post-EMA (as in PyTorch)

    def __call__(self, x, target, block_rows=None):
        if self._last_bin_count is None:
            last = jnp.zeros((self._bins,), jnp.float32)
            aeff = jnp.float32(0.0)          # first call: store raw histogram
        else:
            last = self._last_bin_count
            aeff = jnp.float32(self._alpha)
        loss, new_count = ghm_forward(x, target, last, aeff,
                                      bins=self._bins, block_rows=block_rows)
        self._last_bin_count = new_count
        return loss


# ---------------------------- plain-JAX reference ----------------------------
def _stable_sigmoid(x):
    e = jnp.exp(-jnp.abs(x))
    return jnp.where(x >= 0.0, 1.0 / (1.0 + e), e / (1.0 + e))


def _reference(x, target, bins, alpha, last_bin_count):
    """Reference of the forward pass; returns (loss, stored bin_count)."""
    g = jnp.abs(_stable_sigmoid(x) - target)
    bin_idx = jnp.floor(g * (bins - 0.0001)).astype(jnp.int32)
    bin_count = jnp.array([jnp.sum(bin_idx == i) for i in range(bins)], jnp.float32)
    n = x.shape[0] * x.shape[1]
    if last_bin_count is not None:
        bin_count = alpha * last_bin_count + (1.0 - alpha) * bin_count
    nonempty = jnp.sum(bin_count > 0).astype(jnp.float32)
    gd = jnp.maximum(bin_count * nonempty, 0.0001)
    beta = n / gd
    w = beta[bin_idx]
    bce = jnp.maximum(x, 0.0) - x * target + jnp.log1p(jnp.exp(-jnp.abs(x)))
    return jnp.mean(w * bce), bin_count


if __name__ == "__main__":
    key = jax.random.PRNGKey(0)
    kx, kt = jax.random.split(key)
    R, C = 32, 128                      # 2-D logits [batch, classes]; N = R * C
    x = jax.random.normal(kx, (R, C), dtype=jnp.float32) * 2.0
    target = jax.random.bernoulli(kt, 0.5, (R, C)).astype(jnp.float32)

    loss_fn = GHMCLossPallas(bins=BINS, alpha=ALPHA)

    # block_rows=8 -> 4 grid steps: exercises init / accumulate / finalize.
    loss1 = jax.block_until_ready(loss_fn(x, target, block_rows=8))
    ref1, refcount1 = _reference(x, target, BINS, ALPHA, None)
    assert jnp.allclose(loss1, ref1, rtol=1e-3, atol=1e-3), (loss1, ref1)
    assert jnp.allclose(loss_fn._last_bin_count, refcount1, rtol=1e-5, atol=1e-3)

    # Second call exercises the EMA path.
    loss2 = jax.block_until_ready(loss_fn(x, target, block_rows=8))
    ref2, refcount2 = _reference(x, target, BINS, ALPHA, refcount1)
    assert jnp.allclose(loss2, ref2, rtol=1e-3, atol=1e-3), (loss2, ref2)
    assert jnp.allclose(loss_fn._last_bin_count, refcount2, rtol=1e-5, atol=1e-3)

    # bf16 inputs are accepted directly (in-kernel upcast; half the DMA bytes).
    xb = x.astype(jnp.bfloat16)
    tb = target.astype(jnp.bfloat16)
    loss_fn_b = GHMCLossPallas(bins=BINS, alpha=ALPHA)
    loss_b = jax.block_until_ready(loss_fn_b(xb, tb, block_rows=16))
    ref_b, _ = _reference(xb.astype(jnp.float32), tb.astype(jnp.float32),
                          BINS, ALPHA, None)
    assert jnp.allclose(loss_b, ref_b, rtol=2e-3, atol=2e-3), (loss_b, ref_b)

    print("KERNEL_OK")
</pallas_src>

<mosaic_0001>
module attributes {stable_mosaic.version = 11 : i64} {
  func.func @_ghm_hist_kernel(%arg0: i32, %arg1: memref<8x128xf32, #tpu.memory_space<vmem>>, %arg2: memref<8x128xf32, #tpu.memory_space<vmem>>, %arg3: memref<10xi32, #tpu.memory_space<smem>>, %arg4: memref<10xf32, #tpu.memory_space<smem>>) attributes {dimension_semantics = [#tpu.dimension_semantics<arbitrary>], iteration_bounds = array<i64: 4>, scalar_prefetch = 0 : i64, scratch_operands = 0 : i64, tpu.core_type = #tpu.core_type<tc>, window_params = [{transform_indices = @transform_0, window_bounds = array<i64: 8, 128>}, {transform_indices = @transform_1, window_bounds = array<i64: 8, 128>}, {transform_indices = @transform_2, window_bounds = array<i64: 10>}, {transform_indices = @transform_3, window_bounds = array<i64: 10>}]} {
    %c0_i32 = arith.constant 0 : i32
    %0 = arith.cmpi eq, %arg0, %c0_i32 : i32
    %1 = arith.extui %0 : i1 to i32
    %c0_i32_0 = arith.constant 0 : i32
    %2 = arith.cmpi ne, %1, %c0_i32_0 : i32
    scf.if %2 {
      %c4096_i32 = arith.constant 4096 : i32
      %c0_74 = arith.constant 0 : index
      %204 = memref.load %arg3[%c0_74] : memref<10xi32, #tpu.memory_space<smem>>
      memref.store %c4096_i32, %arg3[%c0_74] : memref<10xi32, #tpu.memory_space<smem>>
      %cst_75 = arith.constant 0.000000e+00 : f32
      %c0_76 = arith.constant 0 : index
      %205 = memref.load %arg4[%c0_76] : memref<10xf32, #tpu.memory_space<smem>>
      memref.store %cst_75, %arg4[%c0_76] : memref<10xf32, #tpu.memory_space<smem>>
      %c0_i32_77 = arith.constant 0 : i32
      %c1_78 = arith.constant 1 : index
      %206 = memref.load %arg3[%c1_78] : memref<10xi32, #tpu.memory_space<smem>>
      memref.store %c0_i32_77, %arg3[%c1_78] : memref<10xi32, #tpu.memory_space<smem>>
      %cst_79 = arith.constant 0.000000e+00 : f32
      %c1_80 = arith.constant 1 : index
      %207 = memref.load %arg4[%c1_80] : memref<10xf32, #tpu.memory_space<smem>>
      memref.store %cst_79, %arg4[%c1_80] : memref<10xf32, #tpu.memory_space<smem>>
      %c0_i32_81 = arith.constant 0 : i32
      %c2_82 = arith.constant 2 : index
      %208 = memref.load %arg3[%c2_82] : memref<10xi32, #tpu.memory_space<smem>>
      memref.store %c0_i32_81, %arg3[%c2_82] : memref<10xi32, #tpu.memory_space<smem>>
      %cst_83 = arith.constant 0.000000e+00 : f32
      %c2_84 = arith.constant 2 : index
      %209 = memref.load %arg4[%c2_84] : memref<10xf32, #tpu.memory_space<smem>>
      memref.store %cst_83, %arg4[%c2_84] : memref<10xf32, #tpu.memory_space<smem>>
      %c0_i32_85 = arith.constant 0 : i32
      %c3_86 = arith.constant 3 : index
      %210 = memref.load %arg3[%c3_86] : memref<10xi32, #tpu.memory_space<smem>>
      memref.store %c0_i32_85, %arg3[%c3_86] : memref<10xi32, #tpu.memory_space<smem>>
      %cst_87 = arith.constant 0.000000e+00 : f32
      %c3_88 = arith.constant 3 : index
      %211 = memref.load %arg4[%c3_88] : memref<10xf32, #tpu.memory_space<smem>>
      memref.store %cst_87, %arg4[%c3_88] : memref<10xf32, #tpu.memory_space<smem>>
      %c0_i32_89 = arith.constant 0 : i32
      %c4_90 = arith.constant 4 : index
      %212 = memref.load %arg3[%c4_90] : memref<10xi32, #tpu.memory_space<smem>>
      memref.store %c0_i32_89, %arg3[%c4_90] : memref<10xi32, #tpu.memory_space<smem>>
      %cst_91 = arith.constant 0.000000e+00 : f32
      %c4_92 = arith.constant 4 : index
      %213 = memref.load %arg4[%c4_92] : memref<10xf32, #tpu.memory_space<smem>>
      memref.store %cst_91, %arg4[%c4_92] : memref<10xf32, #tpu.memory_space<smem>>
      %c0_i32_93 = arith.constant 0 : i32
      %c5_94 = arith.constant 5 : index
      %214 = memref.load %arg3[%c5_94] : memref<10xi32, #tpu.memory_space<smem>>
      memref.store %c0_i32_93, %arg3[%c5_94] : memref<10xi32, #tpu.memory_space<smem>>
      %cst_95 = arith.constant 0.000000e+00 : f32
      %c5_96 = arith.constant 5 : index
      %215 = memref.load %arg4[%c5_96] : memref<10xf32, #tpu.memory_space<smem>>
      memref.store %cst_95, %arg4[%c5_96] : memref<10xf32, #tpu.memory_space<smem>>
      %c0_i32_97 = arith.constant 0 : i32
      %c6_98 = arith.constant 6 : index
      %216 = memref.load %arg3[%c6_98] : memref<10xi32, #tpu.memory_space<smem>>
      memref.store %c0_i32_97, %arg3[%c6_98] : memref<10xi32, #tpu.memory_space<smem>>
      %cst_99 = arith.constant 0.000000e+00 : f32
      %c6_100 = arith.constant 6 : index
      %217 = memref.load %arg4[%c6_100] : memref<10xf32, #tpu.memory_space<smem>>
      memref.store %cst_99, %arg4[%c6_100] : memref<10xf32, #tpu.memory_space<smem>>
      %c0_i32_101 = arith.constant 0 : i32
      %c7_102 = arith.constant 7 : index
      %218 = memref.load %arg3[%c7_102] : memref<10xi32, #tpu.memory_space<smem>>
      memref.store %c0_i32_101, %arg3[%c7_102] : memref<10xi32, #tpu.memory_space<smem>>
      %cst_103 = arith.constant 0.000000e+00 : f32
      %c7_104 = arith.constant 7 : index
      %219 = memref.load %arg4[%c7_104] : memref<10xf32, #tpu.memory_space<smem>>
      memref.store %cst_103, %arg4[%c7_104] : memref<10xf32, #tpu.memory_space<smem>>
      %c0_i32_105 = arith.constant 0 : i32
      %c8_106 = arith.constant 8 : index
      %220 = memref.load %arg3[%c8_106] : memref<10xi32, #tpu.memory_space<smem>>
      memref.store %c0_i32_105, %arg3[%c8_106] : memref<10xi32, #tpu.memory_space<smem>>
      %cst_107 = arith.constant 0.000000e+00 : f32
      %c8_108 = arith.constant 8 : index
      %221 = memref.load %arg4[%c8_108] : memref<10xf32, #tpu.memory_space<smem>>
      memref.store %cst_107, %arg4[%c8_108] : memref<10xf32, #tpu.memory_space<smem>>
      %c0_i32_109 = arith.constant 0 : i32
      %c9_110 = arith.constant 9 : index
      %222 = memref.load %arg3[%c9_110] : memref<10xi32, #tpu.memory_space<smem>>
      memref.store %c0_i32_109, %arg3[%c9_110] : memref<10xi32, #tpu.memory_space<smem>>
      %cst_111 = arith.constant 0.000000e+00 : f32
      %c9_112 = arith.constant 9 : index
      %223 = memref.load %arg4[%c9_112] : memref<10xf32, #tpu.memory_space<smem>>
      memref.store %cst_111, %arg4[%c9_112] : memref<10xf32, #tpu.memory_space<smem>>
    } else {
    }
    %c0 = arith.constant 0 : index
    %c0_1 = arith.constant 0 : index
    %3 = vector.load %arg1[%c0, %c0_1] : memref<8x128xf32, #tpu.memory_space<vmem>>, vector<8x128xf32>
    %c0_2 = arith.constant 0 : index
    %c0_3 = arith.constant 0 : index
    %4 = vector.load %arg2[%c0_2, %c0_3] : memref<8x128xf32, #tpu.memory_space<vmem>>, vector<8x128xf32>
    %5 = math.absf %3 : vector<8x128xf32>
    %cst = arith.constant 0.000000e+00 : f32
    %6 = vector.broadcast %cst : f32 to vector<8x128xf32>
    %7 = arith.subf %6, %5 : vector<8x128xf32>
    %8 = math.exp %7 : vector<8x128xf32>
    %cst_4 = arith.constant 1.000000e+00 : f32
    %9 = vector.broadcast %cst_4 : f32 to vector<8x128xf32>
    %10 = arith.addf %9, %8 : vector<8x128xf32>
    %11 = tpu.reciprocal %10 : vector<8x128xf32> -> vector<8x128xf32>
    %cst_5 = arith.constant 0.000000e+00 : f32
    %12 = vector.broadcast %cst_5 : f32 to vector<8x128xf32>
    %13 = arith.cmpf oge, %3, %12 : vector<8x128xf32>
    %14 = arith.mulf %8, %11 : vector<8x128xf32>
    %15 = arith.select %13, %11, %14 : vector<8x128xi1>, vector<8x128xf32>
    %cst_6 = arith.constant 0.000000e+00 : f32
    %16 = vector.broadcast %cst_6 : f32 to vector<8x128xf32>
    %17 = arith.maximumf %3, %16 : vector<8x128xf32>
    %18 = arith.mulf %3, %4 : vector<8x128xf32>
    %19 = arith.subf %17, %18 : vector<8x128xf32>
    %20 = math.log1p %8 : vector<8x128xf32>
    %21 = arith.addf %19, %20 : vector<8x128xf32>
    %22 = arith.subf %15, %4 : vector<8x128xf32>
    %23 = math.absf %22 : vector<8x128xf32>
    %cst_7 = arith.constant 9.99989986 : f32
    %24 = vector.broadcast %cst_7 : f32 to vector<8x128xf32>
    %25 = arith.mulf %23, %24 : vector<8x128xf32>
    %c0_8 = arith.constant 0 : index
    %26 = memref.load %arg4[%c0_8] : memref<10xf32, #tpu.memory_space<smem>>
    %27 = vector.shape_cast %21 : vector<8x128xf32> to vector<1x8x128xf32>
    %cst_9 = arith.constant dense<0.000000e+00> : vector<1xf32>
    %28 = vector.multi_reduction <add>, %27, %cst_9 [1, 2] : vector<1x8x128xf32> to vector<1xf32>
    %29 = vector.shape_cast %28 : vector<1xf32> to vector<1x1x1xf32>
    %30 = vector.extract %29[0, 0, 0] : f32 from vector<1x1x1xf32>
    %31 = arith.addf %26, %30 : f32
    %c0_10 = arith.constant 0 : index
    %32 = memref.load %arg4[%c0_10] : memref<10xf32, #tpu.memory_space<smem>>
    memref.store %31, %arg4[%c0_10] : memref<10xf32, #tpu.memory_space<smem>>
    %cst_11 = arith.constant 1.000000e+00 : f32
    %33 = vector.broadcast %cst_11 : f32 to vector<8x128xf32>
    %34 = arith.cmpf oge, %25, %33 : vector<8x128xf32>
    %c1 = arith.constant 1 : index
    %35 = memref.load %arg3[%c1] : memref<10xi32, #tpu.memory_space<smem>>
    %36 = arith.extui %34 : vector<8x128xi1> to vector<8x128xi32>
    %37 = vector.shape_cast %36 : vector<8x128xi32> to vector<1x8x128xi32>
    %cst_12 = arith.constant dense<0> : vector<1xi32>
    %38 = vector.multi_reduction <add>, %37, %cst_12 [1, 2] : vector<1x8x128xi32> to vector<1xi32>
    %39 = vector.shape_cast %38 : vector<1xi32> to vector<1x1x1xi32>
    %40 = vector.extract %39[0, 0, 0] : i32 from vector<1x1x1xi32>
    %41 = arith.addi %35, %40 : i32
    %c1_13 = arith.constant 1 : index
    %42 = memref.load %arg3[%c1_13] : memref<10xi32, #tpu.memory_space<smem>>
    memref.store %41, %arg3[%c1_13] : memref<10xi32, #tpu.memory_space<smem>>
    %c1_14 = arith.constant 1 : index
    %43 = memref.load %arg4[%c1_14] : memref<10xf32, #tpu.memory_space<smem>>
    %cst_15 = arith.constant 0.000000e+00 : f32
    %44 = vector.broadcast %cst_15 : f32 to vector<8x128xf32>
    %45 = arith.select %34, %21, %44 : vector<8x128xi1>, vector<8x128xf32>
    %46 = vector.shape_cast %45 : vector<8x128xf32> to vector<1x8x128xf32>
    %cst_16 = arith.constant dense<0.000000e+00> : vector<1xf32>
    %47 = vector.multi_reduction <add>, %46, %cst_16 [1, 2] : vector<1x8x128xf32> to vector<1xf32>
    %48 = vector.shape_cast %47 : vector<1xf32> to vector<1x1x1xf32>
    %49 = vector.extract %48[0, 0, 0] : f32 from vector<1x1x1xf32>
    %50 = arith.addf %43, %49 : f32
    %c1_17 = arith.constant 1 : index
    %51 = memref.load %arg4[%c1_17] : memref<10xf32, #tpu.memory_space<smem>>
    memref.store %50, %arg4[%c1_17] : memref<10xf32, #tpu.memory_space<smem>>
    %cst_18 = arith.constant 2.000000e+00 : f32
    %52 = vector.broadcast %cst_18 : f32 to vector<8x128xf32>
    %53 = arith.cmpf oge, %25, %52 : vector<8x128xf32>
    %c2 = arith.constant 2 : index
    %54 = memref.load %arg3[%c2] : memref<10xi32, #tpu.memory_space<smem>>
    %55 = arith.extui %53 : vector<8x128xi1> to vector<8x128xi32>
    %56 = vector.shape_cast %55 : vector<8x128xi32> to vector<1x8x128xi32>
    %cst_19 = arith.constant dense<0> : vector<1xi32>
    %57 = vector.multi_reduction <add>, %56, %cst_19 [1, 2] : vector<1x8x128xi32> to vector<1xi32>
    %58 = vector.shape_cast %57 : vector<1xi32> to vector<1x1x1xi32>
    %59 = vector.extract %58[0, 0, 0] : i32 from vector<1x1x1xi32>
    %60 = arith.addi %54, %59 : i32
    %c2_20 = arith.constant 2 : index
    %61 = memref.load %arg3[%c2_20] : memref<10xi32, #tpu.memory_space<smem>>
    memref.store %60, %arg3[%c2_20] : memref<10xi32, #tpu.memory_space<smem>>
    %c2_21 = arith.constant 2 : index
    %62 = memref.load %arg4[%c2_21] : memref<10xf32, #tpu.memory_space<smem>>
    %cst_22 = arith.constant 0.000000e+00 : f32
    %63 = vector.broadcast %cst_22 : f32 to vector<8x128xf32>
    %64 = arith.select %53, %21, %63 : vector<8x128xi1>, vector<8x128xf32>
    %65 = vector.shape_cast %64 : vector<8x128xf32> to vector<1x8x128xf32>
    %cst_23 = arith.constant dense<0.000000e+00> : vector<1xf32>
    %66 = vector.multi_reduction <add>, %65, %cst_23 [1, 2] : vector<1x8x128xf32> to vector<1xf32>
    %67 = vector.shape_cast %66 : vector<1xf32> to vector<1x1x1xf32>
    %68 = vector.extract %67[0, 0, 0] : f32 from vector<1x1x1xf32>
    %69 = arith.addf %62, %68 : f32
    %c2_24 = arith.constant 2 : index
    %70 = memref.load %arg4[%c2_24] : memref<10xf32, #tpu.memory_space<smem>>
    memref.store %69, %arg4[%c2_24] : memref<10xf32, #tpu.memory_space<smem>>
    %cst_25 = arith.constant 3.000000e+00 : f32
    %71 = vector.broadcast %cst_25 : f32 to vector<8x128xf32>
    %72 = arith.cmpf oge, %25, %71 : vector<8x128xf32>
    %c3 = arith.constant 3 : index
    %73 = memref.load %arg3[%c3] : memref<10xi32, #tpu.memory_space<smem>>
    %74 = arith.extui %72 : vector<8x128xi1> to vector<8x128xi32>
    %75 = vector.shape_cast %74 : vector<8x128xi32> to vector<1x8x128xi32>
    %cst_26 = arith.constant dense<0> : vector<1xi32>
    %76 = vector.multi_reduction <add>, %75, %cst_26 [1, 2] : vector<1x8x128xi32> to vector<1xi32>
    %77 = vector.shape_cast %76 : vector<1xi32> to vector<1x1x1xi32>
    %78 = vector.extract %77[0, 0, 0] : i32 from vector<1x1x1xi32>
    %79 = arith.addi %73, %78 : i32
    %c3_27 = arith.constant 3 : index
    %80 = memref.load %arg3[%c3_27] : memref<10xi32, #tpu.memory_space<smem>>
    memref.store %79, %arg3[%c3_27] : memref<10xi32, #tpu.memory_space<smem>>
    %c3_28 = arith.constant 3 : index
    %81 = memref.load %arg4[%c3_28] : memref<10xf32, #tpu.memory_space<smem>>
    %cst_29 = arith.constant 0.000000e+00 : f32
    %82 = vector.broadcast %cst_29 : f32 to vector<8x128xf32>
    %83 = arith.select %72, %21, %82 : vector<8x128xi1>, vector<8x128xf32>
    %84 = vector.shape_cast %83 : vector<8x128xf32> to vector<1x8x128xf32>
    %cst_30 = arith.constant dense<0.000000e+00> : vector<1xf32>
    %85 = vector.multi_reduction <add>, %84, %cst_30 [1, 2] : vector<1x8x128xf32> to vector<1xf32>
    %86 = vector.shape_cast %85 : vector<1xf32> to vector<1x1x1xf32>
    %87 = vector.extract %86[0, 0, 0] : f32 from vector<1x1x1xf32>
    %88 = arith.addf %81, %87 : f32
    %c3_31 = arith.constant 3 : index
    %89 = memref.load %arg4[%c3_31] : memref<10xf32, #tpu.memory_space<smem>>
    memref.store %88, %arg4[%c3_31] : memref<10xf32, #tpu.memory_space<smem>>
    %cst_32 = arith.constant 4.000000e+00 : f32
    %90 = vector.broadcast %cst_32 : f32 to vector<8x128xf32>
    %91 = arith.cmpf oge, %25, %90 : vector<8x128xf32>
    %c4 = arith.constant 4 : index
    %92 = memref.load %arg3[%c4] : memref<10xi32, #tpu.memory_space<smem>>
    %93 = arith.extui %91 : vector<8x128xi1> to vector<8x128xi32>
    %94 = vector.shape_cast %93 : vector<8x128xi32> to vector<1x8x128xi32>
    %cst_33 = arith.constant dense<0> : vector<1xi32>
    %95 = vector.multi_reduction <add>, %94, %cst_33 [1, 2] : vector<1x8x128xi32> to vector<1xi32>
    %96 = vector.shape_cast %95 : vector<1xi32> to vector<1x1x1xi32>
    %97 = vector.extract %96[0, 0, 0] : i32 from vector<1x1x1xi32>
    %98 = arith.addi %92, %97 : i32
    %c4_34 = arith.constant 4 : index
    %99 = memref.load %arg3[%c4_34] : memref<10xi32, #tpu.memory_space<smem>>
    memref.store %98, %arg3[%c4_34] : memref<10xi32, #tpu.memory_space<smem>>
    %c4_35 = arith.constant 4 : index
    %100 = memref.load %arg4[%c4_35] : memref<10xf32, #tpu.memory_space<smem>>
    %cst_36 = arith.constant 0.000000e+00 : f32
    %101 = vector.broadcast %cst_36 : f32 to vector<8x128xf32>
    %102 = arith.select %91, %21, %101 : vector<8x128xi1>, vector<8x128xf32>
    %103 = vector.shape_cast %102 : vector<8x128xf32> to vector<1x8x128xf32>
    %cst_37 = arith.constant dense<0.000000e+00> : vector<1xf32>
    %104 = vector.multi_reduction <add>, %103, %cst_37 [1, 2] : vector<1x8x128xf32> to vector<1xf32>
    %105 = vector.shape_cast %104 : vector<1xf32> to vector<1x1x1xf32>
    %106 = vector.extract %105[0, 0, 0] : f32 from vector<1x1x1xf32>
    %107 = arith.addf %100, %106 : f32
    %c4_38 = arith.constant 4 : index
    %108 = memref.load %arg4[%c4_38] : memref<10xf32, #tpu.memory_space<smem>>
    memref.store %107, %arg4[%c4_38] : memref<10xf32, #tpu.memory_space<smem>>
    %cst_39 = arith.constant 5.000000e+00 : f32
    %109 = vector.broadcast %cst_39 : f32 to vector<8x128xf32>
    %110 = arith.cmpf oge, %25, %109 : vector<8x128xf32>
    %c5 = arith.constant 5 : index
    %111 = memref.load %arg3[%c5] : memref<10xi32, #tpu.memory_space<smem>>
    %112 = arith.extui %110 : vector<8x128xi1> to vector<8x128xi32>
    %113 = vector.shape_cast %112 : vector<8x128xi32> to vector<1x8x128xi32>
    %cst_40 = arith.constant dense<0> : vector<1xi32>
    %114 = vector.multi_reduction <add>, %113, %cst_40 [1, 2] : vector<1x8x128xi32> to vector<1xi32>
    %115 = vector.shape_cast %114 : vector<1xi32> to vector<1x1x1xi32>
    %116 = vector.extract %115[0, 0, 0] : i32 from vector<1x1x1xi32>
    %117 = arith.addi %111, %116 : i32
    %c5_41 = arith.constant 5 : index
    %118 = memref.load %arg3[%c5_41] : memref<10xi32, #tpu.memory_space<smem>>
    memref.store %117, %arg3[%c5_41] : memref<10xi32, #tpu.memory_space<smem>>
    %c5_42 = arith.constant 5 : index
    %119 = memref.load %arg4[%c5_42] : memref<10xf32, #tpu.memory_space<smem>>
    %cst_43 = arith.constant 0.000000e+00 : f32
    %120 = vector.broadcast %cst_43 : f32 to vector<8x128xf32>
    %121 = arith.select %110, %21, %120 : vector<8x128xi1>, vector<8x128xf32>
    %122 = vector.shape_cast %121 : vector<8x128xf32> to vector<1x8x128xf32>
    %cst_44 = arith.constant dense<0.000000e+00> : vector<1xf32>
    %123 = vector.multi_reduction <add>, %122, %cst_44 [1, 2] : vector<1x8x128xf32> to vector<1xf32>
    %124 = vector.shape_cast %123 : vector<1xf32> to vector<1x1x1xf32>
    %125 = vector.extract %124[0, 0, 0] : f32 from vector<1x1x1xf32>
    %126 = arith.addf %119, %125 : f32
    %c5_45 = arith.constant 5 : index
    %127 = memref.load %arg4[%c5_45] : memref<10xf32, #tpu.memory_space<smem>>
    memref.store %126, %arg4[%c5_45] : memref<10xf32, #tpu.memory_space<smem>>
    %cst_46 = arith.constant 6.000000e+00 : f32
    %128 = vector.broadcast %cst_46 : f32 to vector<8x128xf32>
    %129 = arith.cmpf oge, %25, %128 : vector<8x128xf32>
    %c6 = arith.constant 6 : index
    %130 = memref.load %arg3[%c6] : memref<10xi32, #tpu.memory_space<smem>>
    %131 = arith.extui %129 : vector<8x128xi1> to vector<8x128xi32>
    %132 = vector.shape_cast %131 : vector<8x128xi32> to vector<1x8x128xi32>
    %cst_47 = arith.constant dense<0> : vector<1xi32>
    %133 = vector.multi_reduction <add>, %132, %cst_47 [1, 2] : vector<1x8x128xi32> to vector<1xi32>
    %134 = vector.shape_cast %133 : vector<1xi32> to vector<1x1x1xi32>
    %135 = vector.extract %134[0, 0, 0] : i32 from vector<1x1x1xi32>
    %136 = arith.addi %130, %135 : i32
    %c6_48 = arith.constant 6 : index
    %137 = memref.load %arg3[%c6_48] : memref<10xi32, #tpu.memory_space<smem>>
    memref.store %136, %arg3[%c6_48] : memref<10xi32, #tpu.memory_space<smem>>
    %c6_49 = arith.constant 6 : index
    %138 = memref.load %arg4[%c6_49] : memref<10xf32, #tpu.memory_space<smem>>
    %cst_50 = arith.constant 0.000000e+00 : f32
    %139 = vector.broadcast %cst_50 : f32 to vector<8x128xf32>
    %140 = arith.select %129, %21, %139 : vector<8x128xi1>, vector<8x128xf32>
    %141 = vector.shape_cast %140 : vector<8x128xf32> to vector<1x8x128xf32>
    %cst_51 = arith.constant dense<0.000000e+00> : vector<1xf32>
    %142 = vector.multi_reduction <add>, %141, %cst_51 [1, 2] : vector<1x8x128xf32> to vector<1xf32>
    %143 = vector.shape_cast %142 : vector<1xf32> to vector<1x1x1xf32>
    %144 = vector.extract %143[0, 0, 0] : f32 from vector<1x1x1xf32>
    %145 = arith.addf %138, %144 : f32
    %c6_52 = arith.constant 6 : index
    %146 = memref.load %arg4[%c6_52] : memref<10xf32, #tpu.memory_space<smem>>
    memref.store %145, %arg4[%c6_52] : memref<10xf32, #tpu.memory_space<smem>>
    %cst_53 = arith.constant 7.000000e+00 : f32
    %147 = vector.broadcast %cst_53 : f32 to vector<8x128xf32>
    %148 = arith.cmpf oge, %25, %147 : vector<8x128xf32>
    %c7 = arith.constant 7 : index
    %149 = memref.load %arg3[%c7] : memref<10xi32, #tpu.memory_space<smem>>
    %150 = arith.extui %148 : vector<8x128xi1> to vector<8x128xi32>
    %151 = vector.shape_cast %150 : vector<8x128xi32> to vector<1x8x128xi32>
    %cst_54 = arith.constant dense<0> : vector<1xi32>
    %152 = vector.multi_reduction <add>, %151, %cst_54 [1, 2] : vector<1x8x128xi32> to vector<1xi32>
    %153 = vector.shape_cast %152 : vector<1xi32> to vector<1x1x1xi32>
    %154 = vector.extract %153[0, 0, 0] : i32 from vector<1x1x1xi32>
    %155 = arith.addi %149, %154 : i32
    %c7_55 = arith.constant 7 : index
    %156 = memref.load %arg3[%c7_55] : memref<10xi32, #tpu.memory_space<smem>>
    memref.store %155, %arg3[%c7_55] : memref<10xi32, #tpu.memory_space<smem>>
    %c7_56 = arith.constant 7 : index
    %157 = memref.load %arg4[%c7_56] : memref<10xf32, #tpu.memory_space<smem>>
    %cst_57 = arith.constant 0.000000e+00 : f32
    %158 = vector.broadcast %cst_57 : f32 to vector<8x128xf32>
    %159 = arith.select %148, %21, %158 : vector<8x128xi1>, vector<8x128xf32>
    %160 = vector.shape_cast %159 : vector<8x128xf32> to vector<1x8x128xf32>
    %cst_58 = arith.constant dense<0.000000e+00> : vector<1xf32>
    %161 = vector.multi_reduction <add>, %160, %cst_58 [1, 2] : vector<1x8x128xf32> to vector<1xf32>
    %162 = vector.shape_cast %161 : vector<1xf32> to vector<1x1x1xf32>
    %163 = vector.extract %162[0, 0, 0] : f32 from vector<1x1x1xf32>
    %164 = arith.addf %157, %163 : f32
    %c7_59 = arith.constant 7 : index
    %165 = memref.load %arg4[%c7_59] : memref<10xf32, #tpu.memory_space<smem>>
    memref.store %164, %arg4[%c7_59] : memref<10xf32, #tpu.memory_space<smem>>
    %cst_60 = arith.constant 8.000000e+00 : f32
    %166 = vector.broadcast %cst_60 : f32 to vector<8x128xf32>
    %167 = arith.cmpf oge, %25, %166 : vector<8x128xf32>
    %c8 = arith.constant 8 : index
    %168 = memref.load %arg3[%c8] : memref<10xi32, #tpu.memory_space<smem>>
    %169 = arith.extui %167 : vector<8x128xi1> to vector<8x128xi32>
    %170 = vector.shape_cast %169 : vector<8x128xi32> to vector<1x8x128xi32>
    %cst_61 = arith.constant dense<0> : vector<1xi32>
    %171 = vector.multi_reduction <add>, %170, %cst_61 [1, 2] : vector<1x8x128xi32> to vector<1xi32>
    %172 = vector.shape_cast %171 : vector<1xi32> to vector<1x1x1xi32>
    %173 = vector.extract %172[0, 0, 0] : i32 from vector<1x1x1xi32>
    %174 = arith.addi %168, %173 : i32
    %c8_62 = arith.constant 8 : index
    %175 = memref.load %arg3[%c8_62] : memref<10xi32, #tpu.memory_space<smem>>
    memref.store %174, %arg3[%c8_62] : memref<10xi32, #tpu.memory_space<smem>>
    %c8_63 = arith.constant 8 : index
    %176 = memref.load %arg4[%c8_63] : memref<10xf32, #tpu.memory_space<smem>>
    %cst_64 = arith.constant 0.000000e+00 : f32
    %177 = vector.broadcast %cst_64 : f32 to vector<8x128xf32>
    %178 = arith.select %167, %21, %177 : vector<8x128xi1>, vector<8x128xf32>
    %179 = vector.shape_cast %178 : vector<8x128xf32> to vector<1x8x128xf32>
    %cst_65 = arith.constant dense<0.000000e+00> : vector<1xf32>
    %180 = vector.multi_reduction <add>, %179, %cst_65 [1, 2] : vector<1x8x128xf32> to vector<1xf32>
    %181 = vector.shape_cast %180 : vector<1xf32> to vector<1x1x1xf32>
    %182 = vector.extract %181[0, 0, 0] : f32 from vector<1x1x1xf32>
    %183 = arith.addf %176, %182 : f32
    %c8_66 = arith.constant 8 : index
    %184 = memref.load %arg4[%c8_66] : memref<10xf32, #tpu.memory_space<smem>>
    memref.store %183, %arg4[%c8_66] : memref<10xf32, #tpu.memory_space<smem>>
    %cst_67 = arith.constant 9.000000e+00 : f32
    %185 = vector.broadcast %cst_67 : f32 to vector<8x128xf32>
    %186 = arith.cmpf oge, %25, %185 : vector<8x128xf32>
    %c9 = arith.constant 9 : index
    %187 = memref.load %arg3[%c9] : memref<10xi32, #tpu.memory_space<smem>>
    %188 = arith.extui %186 : vector<8x128xi1> to vector<8x128xi32>
    %189 = vector.shape_cast %188 : vector<8x128xi32> to vector<1x8x128xi32>
    %cst_68 = arith.constant dense<0> : vector<1xi32>
    %190 = vector.multi_reduction <add>, %189, %cst_68 [1, 2] : vector<1x8x128xi32> to vector<1xi32>
    %191 = vector.shape_cast %190 : vector<1xi32> to vector<1x1x1xi32>
    %192 = vector.extract %191[0, 0, 0] : i32 from vector<1x1x1xi32>
    %193 = arith.addi %187, %192 : i32
    %c9_69 = arith.constant 9 : index
    %194 = memref.load %arg3[%c9_69] : memref<10xi32, #tpu.memory_space<smem>>
    memref.store %193, %arg3[%c9_69] : memref<10xi32, #tpu.memory_space<smem>>
    %c9_70 = arith.constant 9 : index
    %195 = memref.load %arg4[%c9_70] : memref<10xf32, #tpu.memory_space<smem>>
    %cst_71 = arith.constant 0.000000e+00 : f32
    %196 = vector.broadcast %cst_71 : f32 to vector<8x128xf32>
    %197 = arith.select %186, %21, %196 : vector<8x128xi1>, vector<8x128xf32>
    %198 = vector.shape_cast %197 : vector<8x128xf32> to vector<1x8x128xf32>
    %cst_72 = arith.constant dense<0.000000e+00> : vector<1xf32>
    %199 = vector.multi_reduction <add>, %198, %cst_72 [1, 2] : vector<1x8x128xf32> to vector<1xf32>
    %200 = vector.shape_cast %199 : vector<1xf32> to vector<1x1x1xf32>
    %201 = vector.extract %200[0, 0, 0] : f32 from vector<1x1x1xf32>
    %202 = arith.addf %195, %201 : f32
    %c9_73 = arith.constant 9 : index
    %203 = memref.load %arg4[%c9_73] : memref<10xf32, #tpu.memory_space<smem>>
    memref.store %202, %arg4[%c9_73] : memref<10xf32, #tpu.memory_space<smem>>
    return
  }
  func.func @transform_0(%arg0: i32) -> (i32, i32) {
    %c0_i32 = arith.constant 0 : i32
    %c0_i32_0 = arith.constant 0 : i32
    return %arg0, %c0_i32 : i32, i32
  }
  func.func @transform_1(%arg0: i32) -> (i32, i32) {
    %c0_i32 = arith.constant 0 : i32
    %c0_i32_0 = arith.constant 0 : i32
    return %arg0, %c0_i32 : i32, i32
  }
  func.func @transform_2(%arg0: i32) -> i32 {
    %c0_i32 = arith.constant 0 : i32
    %c0_i32_0 = arith.constant 0 : i32
    return %c0_i32 : i32
  }
  func.func @transform_3(%arg0: i32) -> i32 {
    %c0_i32 = arith.constant 0 : i32
    %c0_i32_0 = arith.constant 0 : i32
    return %c0_i32 : i32
  }
}

</mosaic_0001>

<llo_original>
// kernel: ghm_forward.1
$region0: #{ghm_forward.1}
  #allocation0 [shape = 'u32[]', space=smem, size = 0x4, offset = 0x4, fixed_abs, tag = 'smem constant byte address 0x4 - core index']
  #allocation1 [shape = 'u32[144,128]{1,0:T(1,128)}', space=vmem, size = 0x12000, scoped, tag = 'internal scratch']
  %s0 = inlined_call_operand.hbm [shape: f32[32,128], index: 0, kind: input, shape index: {}]
  %s1 = inlined_call_operand.hbm [shape: f32[32,128], index: 1, kind: input, shape index: {}]
  %s2 = inlined_call_operand.vmem [shape: s32[10], index: 2, kind: output, shape index: {0}]
  %s3 = inlined_call_operand.vmem [shape: f32[10], index: 3, kind: output, shape index: {1}]
  %4 = xla_tuple %s2, %s3
  %s5 = sld [smem:[#allocation0]]
  $region61: #{ghm_forward.1} parent=0
    _
  %s7 = ssub.s32 1, %s5
  %s8 = scalar_select 0, %s7, %s5
  $region1: #{ghm_forward.1} parent=0
    #allocation2 [shape = 'u8[8192]{0}', space=vmem, size = 0x2000, scoped, tag = 'input window, operand 0']
    #allocation3 [shape = 's32[2]{0}', space=sflag, size = 0x8, scoped, tag = 'scoped memory for ghm_forward.1']
    #allocation4 [shape = 's32[2]{0}', space=sflag, size = 0x8, scoped, tag = 'scoped memory for ghm_forward.1']
    #allocation5 [shape = 'u8[8192]{0}', space=vmem, size = 0x2000, scoped, tag = 'input window, operand 1']
    #allocation6 [shape = 's32[2]{0}', space=sflag, size = 0x8, scoped, tag = 'scoped memory for ghm_forward.1']
    #allocation7 [shape = 'u8[512]{0}', space=smem, size = 0x200, scoped, tag = 'output window, operand 0, single buffered']
    #allocation8 [shape = 'u8[512]{0}', space=smem, size = 0x200, scoped, tag = 'output window, operand 1, single buffered']
    #allocation9 [shape = 's32[1]{0}', space=sflag, size = 0x4, scoped, tag = 'scoped memory for ghm_forward.1']
    %9 = vsyncpa [#allocation3], 0
    %s10 = scalar_lea.sflag [#allocation3], 1
    %11 = vsyncpa %s10, 0
    %12 = vsyncpa [#allocation6], 0
    %s13 = scalar_lea.sflag [#allocation6], 1
    %14 = vsyncpa %s13, 0
    %15 = vsyncpa [#allocation4], 0
    %16 = vsyncpa [#allocation9], 0
    loop: start=0, step=1, limit=6
    $region2: #{ghm_forward.1} parent=1 // loop_pre_header
      _
    $region3: #{ghm_forward.1} parent=1 // loop_header
      %s18 = sphi 0, %s22
      %p19 = scmp.ge.s32.totalorder %s18, 6
      %s28 = sphi 0, %s30
      %s31 = sphi 0, %s28
      %s32 = sphi 0, %s31
      %s48 = sphi 0, %s32
      %s54 = sphi 0, %s56
      %s57 = sphi 0, %s54
      %s58 = sphi 0, %s57
      %s74 = sphi 0, %s58
      %s78 = sphi 0, %s78
      %s80 = sphi 0, %s78
      %s81 = sphi 0, %s80
      %s95 = sphi 0, %s81
      %s99 = sphi 0, %s99
      %s101 = sphi 0, %s99
      %s102 = sphi 0, %s101
      %s116 = sphi 0, %s102
    $region4: #{ghm_forward.1} parent=1 // loop_header_branch
      %21 = sbr.rel (%p19) target = $region8
    $region5: #{ghm_forward.1} parent=1 // loop_body
      %s23 = ssub.s32 %s18, 1
      %s24 = ssub.s32 %s18, 2
      %s25 = sadd.s32 %s18, 1
      %s26 = ssub.s32 %s18, %s25
      %p27 = scmp.eq.s32.totalorder %s26, 0
      %s29 = sadd.s32 %s28, 1
      %s30 = scalar_select %p27, %s28, %s29
      %p33 = pneg %p27
      %p34 = scmp.eq.s32.totalorder %s18, 3
      %p35 = por %p33, %p34
      %p36 = scmp.ne.s32.totalorder %s28, %s31
      %p37 = scmp.eq.s32.totalorder %s18, 0
      %p38 = por %p36, %p37
      %p39 = scmp.ne.s32.totalorder %s28, %s31
      %p40 = scmp.eq.s32.totalorder %s23, 3
      %p41 = por %p39, %p40
      %p42 = scmp.ne.s32.totalorder %s31, %s32
      %p43 = scmp.eq.s32.totalorder %s23, 0
      %p44 = por %p42, %p43
      %p45 = scmp.ne.s32.totalorder %s31, %s32
      %p46 = scmp.eq.s32.totalorder %s24, 3
      %p47 = por %p45, %p46
      %p49 = scmp.ne.s32.totalorder %s32, %s48
      %p50 = scmp.eq.s32.totalorder %s24, 0
      %p51 = por %p49, %p50
      %s52 = ssub.s32 %s18, %s25
      %p53 = scmp.eq.s32.totalorder %s52, 0
      %s55 = sadd.s32 %s54, 1
      %s56 = scalar_select %p53, %s54, %s55
      %p59 = pneg %p53
      %p60 = scmp.eq.s32.totalorder %s18, 3
      %p61 = por %p59, %p60
      %p62 = scmp.ne.s32.totalorder %s54, %s57
      %p63 = scmp.eq.s32.totalorder %s18, 0
      %p64 = por %p62, %p63
      %p65 = scmp.ne.s32.totalorder %s54, %s57
      %p66 = scmp.eq.s32.totalorder %s23, 3
      %p67 = por %p65, %p66
      %p68 = scmp.ne.s32.totalorder %s57, %s58
      %p69 = scmp.eq.s32.totalorder %s23, 0
      %p70 = por %p68, %p69
      %p71 = scmp.ne.s32.totalorder %s57, %s58
      %p72 = scmp.eq.s32.totalorder %s24, 3
      %p73 = por %p71, %p72
      %p75 = scmp.ne.s32.totalorder %s58, %s74
      %p76 = scmp.eq.s32.totalorder %s24, 0
      %p77 = por %p75, %p76
      %s79 = sadd.s32 %s78, 1
      %p82 = scmp.eq.s32.totalorder %s18, 3
      %p83 = scmp.ne.s32.totalorder %s78, %s80
      %p84 = scmp.eq.s32.totalorder %s18, 0
      %p85 = por %p83, %p84
      %p86 = scmp.ne.s32.totalorder %s78, %s80
      %p87 = scmp.eq.s32.totalorder %s23, 3
      %p88 = por %p86, %p87
      %p89 = scmp.ne.s32.totalorder %s80, %s81
      %p90 = scmp.eq.s32.totalorder %s23, 0
      %p91 = por %p89, %p90
      %p92 = scmp.ne.s32.totalorder %s80, %s81
      %p93 = scmp.eq.s32.totalorder %s24, 3
      %p94 = por %p92, %p93
      %p96 = scmp.ne.s32.totalorder %s81, %s95
      %p97 = scmp.eq.s32.totalorder %s24, 0
      %p98 = por %p96, %p97
      %s100 = sadd.s32 %s99, 1
      %p103 = scmp.eq.s32.totalorder %s18, 3
      %p104 = scmp.ne.s32.totalorder %s99, %s101
      %p105 = scmp.eq.s32.totalorder %s18, 0
      %p106 = por %p104, %p105
      %p107 = scmp.ne.s32.totalorder %s99, %s101
      %p108 = scmp.eq.s32.totalorder %s23, 3
      %p109 = por %p107, %p108
      %p110 = scmp.ne.s32.totalorder %s101, %s102
      %p111 = scmp.eq.s32.totalorder %s23, 0
      %p112 = por %p110, %p111
      %p113 = scmp.ne.s32.totalorder %s101, %s102
      %p114 = scmp.eq.s32.totalorder %s24, 3
      %p115 = por %p113, %p114
      %p117 = scmp.ne.s32.totalorder %s102, %s116
      %p118 = scmp.eq.s32.totalorder %s24, 0
      %p119 = por %p117, %p118
      %p120 = scmp.le.s32.totalorder 1, %s18
      %p121 = scmp.lt.s32.totalorder %s18, 5
      %p122 = pnand %p120, %p121
      %p123 = pneg %p122
      // Predicated region
      $region9: #{ghm_forward.1} parent=5 // pred_check
        _
      $region10: #{ghm_forward.1} parent=5 // pred_check_branch
        %125 = sbr.rel (%p122) target = $region12
      $region11: #{ghm_forward.1} parent=5 // pred_region
        %s126 = ssub.s32 %s18, 1
      $region12: #{ghm_forward.1} parent=5 // pred_fallthru
        _
      %p127 = scmp.lt.s32.totalorder %s18, 4
      // Predicated region
      $region13: #{ghm_forward.1} parent=5 // pred_check
        %p128 = pneg %p127
      $region14: #{ghm_forward.1} parent=5 // pred_check_branch
        %130 = sbr.rel (%p128) target = $region16
      $region15: #{ghm_forward.1} parent=5 // pred_region
        // Predicated region
        $region17: #{ghm_forward.1} parent=15 // pred_check
          %p131 = pneg %p38
        $region18: #{ghm_forward.1} parent=15 // pred_check_branch
          %133 = sbr.rel (%p131) target = $region20
        $region19: #{ghm_forward.1} parent=15 // pred_region
          %s134 = sand.u32 %s28, 1
          %s135 = scalar_lea.sflag [#allocation3], %s134
          %s136 = sand.u32 %s28, 1
          %s137 = smul.addr %s136, 8
          %s138 = scalar_lea.vmem [#allocation2], %s137
          %s140 = ssub.s32 128, 128
          %141 = vsyncadd %s135, %s140
          %s142 = smul.addr %s18, 128
          %s143 = scalar_lea.hbm %s0, %s142
          %s145 = sshll.u32 %s138, 4
          %s146 = int_to_ptr.vmem [resolvable:$true] %s145
          %148 = dma.hbm_to_vmem [thread:$0]  %s143, 128, %s146, %s135
        $region20: #{ghm_forward.1} parent=15 // pred_fallthru
          _
        // Predicated region
        $region21: #{ghm_forward.1} parent=15 // pred_check
          %p149 = pneg %p64
        $region22: #{ghm_forward.1} parent=15 // pred_check_branch
          %151 = sbr.rel (%p149) target = $region24
        $region23: #{ghm_forward.1} parent=15 // pred_region
          %s152 = sand.u32 %s54, 1
          %s153 = scalar_lea.sflag [#allocation6], %s152
          %s154 = sand.u32 %s54, 1
          %s155 = smul.addr %s154, 8
          %s156 = scalar_lea.vmem [#allocation5], %s155
          %s158 = ssub.s32 128, 128
          %159 = vsyncadd %s153, %s158
          %s160 = smul.addr %s18, 128
          %s161 = scalar_lea.hbm %s1, %s160
          %s163 = sshll.u32 %s156, 4
          %s164 = int_to_ptr.vmem [resolvable:$true] %s163
          %166 = dma.hbm_to_vmem [thread:$0]  %s161, 128, %s164, %s153
        $region24: #{ghm_forward.1} parent=15 // pred_fallthru
          _
      $region16: #{ghm_forward.1} parent=5 // pred_fallthru
        _
      %p167 = scmp.le.s32.totalorder 1, %s18
      %p168 = scmp.lt.s32.totalorder %s18, 5
      %p169 = pnand %p167, %p168
      %p170 = pneg %p169
      // Predicated region
      $region25: #{ghm_forward.1} parent=5 // pred_check
        _
      $region26: #{ghm_forward.1} parent=5 // pred_check_branch
        %172 = sbr.rel (%p169) target = $region28
      $region27: #{ghm_forward.1} parent=5 // pred_region
        %s173 = ssub.s32 %s18, 1
        %s174 = sand.u32 %s31, 1
        %s175 = scalar_lea.sflag [#allocation3], %s174
        %s176 = sand.u32 %s31, 1
        %s177 = smul.addr %s176, 8
        %s178 = scalar_lea.vmem [#allocation2], %s177
        // Predicated region
        $region29: #{ghm_forward.1} parent=27 // pred_check
          %p179 = pneg %p44
        $region30: #{ghm_forward.1} parent=27 // pred_check_branch
          %181 = sbr.rel (%p179) target = $region32
        $region31: #{ghm_forward.1} parent=27 // pred_region
          %182 = dma.done %s175, 128
        $region32: #{ghm_forward.1} parent=27 // pred_fallthru
          _
        %s183 = sand.u32 %s57, 1
        %s184 = scalar_lea.sflag [#allocation6], %s183
        %s185 = sand.u32 %s57, 1
        %s186 = smul.addr %s185, 8
        %s187 = scalar_lea.vmem [#allocation5], %s186
        // Predicated region
        $region33: #{ghm_forward.1} parent=27 // pred_check
          %p188 = pneg %p70
        $region34: #{ghm_forward.1} parent=27 // pred_check_branch
          %190 = sbr.rel (%p188) target = $region36
        $region35: #{ghm_forward.1} parent=27 // pred_region
          %191 = dma.done %s184, 128
        $region36: #{ghm_forward.1} parent=27 // pred_fallthru
          _
        %s192 = sand.u32 %s31, 1
        %s193 = scalar_lea.sflag [#allocation3], %s192
        %s194 = sand.u32 %s31, 1
        %s195 = smul.addr %s194, 8
        %s196 = scalar_lea.vmem [#allocation2], %s195
        %p197 = pneg %p44
        %p198 = pneg %p41
        %s199 = sand.u32 %s57, 1
        %s200 = scalar_lea.sflag [#allocation6], %s199
        %s201 = sand.u32 %s57, 1
        %s202 = smul.addr %s201, 8
        %s203 = scalar_lea.vmem [#allocation5], %s202
        %p204 = pneg %p70
        %p205 = pneg %p67
        %p206 = pneg %p91
        %p207 = pneg %p88
        %p208 = pneg %p112
        %p209 = pneg %p109
        %p210 = scmp.eq.s32.totalorder %s23, 0
        // Predicated region
        $region37: #{ghm_forward.1} parent=27 // pred_check
          %p211 = pneg %p210
        $region38: #{ghm_forward.1} parent=27 // pred_check_branch
          %213 = sbr.rel (%p211) target = $region40
        $region39: #{ghm_forward.1} parent=27 // pred_region
          %s214 = scalar_lea.smem [#allocation7], 0
          %215 = sst [smem:[%s214]] 4096
          %s216 = scalar_lea.smem [#allocation8], 0
          %217 = sst [smem:[%s216]] 0.0
          %s218 = scalar_lea.smem [#allocation7], 1
          %219 = sst [smem:[%s218]] 0
          %s220 = scalar_lea.smem [#allocation8], 1
          %221 = sst [smem:[%s220]] 0.0
          %s222 = scalar_lea.smem [#allocation7], 2
          %223 = sst [smem:[%s222]] 0
          %s224 = scalar_lea.smem [#allocation8], 2
          %225 = sst [smem:[%s224]] 0.0
          %s226 = scalar_lea.smem [#allocation7], 3
          %227 = sst [smem:[%s226]] 0
          %s228 = scalar_lea.smem [#allocation8], 3
          %229 = sst [smem:[%s228]] 0.0
          %s230 = scalar_lea.smem [#allocation7], 4
          %231 = sst [smem:[%s230]] 0
          %s232 = scalar_lea.smem [#allocation8], 4
          %233 = sst [smem:[%s232]] 0.0
          %s234 = scalar_lea.smem [#allocation7], 5
          %235 = sst [smem:[%s234]] 0
          %s236 = scalar_lea.smem [#allocation8], 5
          %237 = sst [smem:[%s236]] 0.0
          %s238 = scalar_lea.smem [#allocation7], 6
          %239 = sst [smem:[%s238]] 0
          %s240 = scalar_lea.smem [#allocation8], 6
          %241 = sst [smem:[%s240]] 0.0
          %s242 = scalar_lea.smem [#allocation7], 7
          %243 = sst [smem:[%s242]] 0
          %s244 = scalar_lea.smem [#allocation8], 7
          %245 = sst [smem:[%s244]] 0.0
          %s246 = scalar_lea.smem [#allocation7], 8
          %247 = sst [smem:[%s246]] 0
          %s248 = scalar_lea.smem [#allocation8], 8
          %249 = sst [smem:[%s248]] 0.0
          %s250 = scalar_lea.smem [#allocation7], 9
          %251 = sst [smem:[%s250]] 0
          %s252 = scalar_lea.smem [#allocation8], 9
          %253 = sst [smem:[%s252]] 0.0
        $region40: #{ghm_forward.1} parent=27 // pred_fallthru
          _
        %v254 = vld [vmem:[%s178] sm:$0xff]
        %v255 = vld [vmem:[%s187] sm:$0xff]
        %v256 = vand.u32 2147483647, %v254
        %v257 = vsub.f32 0.0, %v256
        %v258 = vmul.f32 %v257, 1.442695
        %v259 = vpow.pop %v258
        %v260 = vadd.f32 %v259, 1.0
        %v261 = vrcp.pop %v260
        %vm262 = vcmp.ge.f32.partialorder %v254, 0.0
        %v263 = vmul.f32 %v259, %v261
        %v264 = vsel %vm262, %v261, %v263
        %v265 = vmax.f32 %v254, 0.0
        %v266 = vmul.f32 %v254, %v255
        %v267 = vsub.f32 %v265, %v266
        %v268 = vadd.f32 %v259, 1.0
        %v269 = vlog2.pop %v268
        %v270 = vmul.f32 %v269, 0.6931472
        %v271 = vmul.f32 -0.5, %v259
        %v272 = vadd.f32 %v271, 1.0
        %v273 = vmul.f32 %v272, %v259
        %v274 = vand.u32 2147483647, %v259
        %vm275 = vcmp.lt.f32.partialorder %v274, 0.0004427343
        %v276 = vsel %vm275, %v273, %v270
        %v277 = vadd.f32 %v267, %v276
        %v278 = vsub.f32 %v264, %v255
        %v279 = vand.u32 2147483647, %v278
        %v280 = vmul.f32 %v279, 9.9999
        %s281 = sld [smem:[#allocation8]]
        %282 = vadd.xlane.f32.xlu0 %v277
        %v283 = vpop.xlane.xlu0 %282
        %v284 = vrot.slane %v283, 4
        %v285 = vadd.f32 %v283, %v284
        %v286 = vrot.slane %v285, 2
        %v287 = vadd.f32 %v285, %v286
        %v288 = vrot.slane %v287, 1
        %v289 = vadd.f32 %v287, %v288
        %s290 = vtos %v289
        %s291 = sadd.f32 %s281, %s290
        %s292 = scalar_lea.smem [#allocation8], 0
        %293 = sst [smem:[%s292]] %s291
        %vm294 = vcmp.ge.f32.partialorder %v280, 1.0
        %s295 = sld [smem:[#allocation7 + $0x1]]
        %v296 = vsel %vm294, 1, 0
        %v297 = vand.u32 %v296, 65535
        %v298 = vshrl.u32 %v296, 16
        %v299 = vcvt.s32.f32 %v297
        %v300 = vcvt.s32.f32 %v298
        %301 = vadd.xlane.f32.xlu0 %v299
        %v302 = vpop.xlane.xlu0 %301
        %303 = vadd.xlane.f32.xlu0 %v300
        %v304 = vpop.xlane.xlu0 %303
        %v305 = vcvt.f32.s32 %v302
        %v306 = vcvt.f32.s32 %v304
        %v307 = vshll.u32 %v306, 16
        %v308 = vadd.s32 %v307, %v305
        %v309 = vrot.slane %v308, 4
        %v310 = vadd.s32 %v308, %v309
        %v311 = vrot.slane %v310, 2
        %v312 = vadd.s32 %v310, %v311
        %v313 = vrot.slane %v312, 1
        %v314 = vadd.s32 %v312, %v313
        %s315 = vtos %v314
        %s316 = sadd.s32 %s295, %s315
        %s317 = scalar_lea.smem [#allocation7], 1
        %318 = sst [smem:[%s317]] %s316
        %s319 = sld [smem:[#allocation8 + $0x1]]
        %v320 = vsel %vm294, %v277, 0.0
        %321 = vadd.xlane.f32.xlu0 %v320
        %v322 = vpop.xlane.xlu0 %321
        %v323 = vrot.slane %v322, 4
        %v324 = vadd.f32 %v322, %v323
        %v325 = vrot.slane %v324, 2
        %v326 = vadd.f32 %v324, %v325
        %v327 = vrot.slane %v326, 1
        %v328 = vadd.f32 %v326, %v327
        %s329 = vtos %v328
        %s330 = sadd.f32 %s319, %s329
        %s331 = scalar_lea.smem [#allocation8], 1
        %332 = sst [smem:[%s331]] %s330
        %vm333 = vcmp.ge.f32.partialorder %v280, 2.0
        %s334 = sld [smem:[#allocation7 + $0x2]]
        %v335 = vsel %vm333, 1, 0
        %v336 = vand.u32 %v335, 65535
        %v337 = vshrl.u32 %v335, 16
        %v338 = vcvt.s32.f32 %v336
        %v339 = vcvt.s32.f32 %v337
        %340 = vadd.xlane.f32.xlu0 %v338
        %v341 = vpop.xlane.xlu0 %340
        %342 = vadd.xlane.f32.xlu0 %v339
        %v343 = vpop.xlane.xlu0 %342
        %v344 = vcvt.f32.s32 %v341
        %v345 = vcvt.f32.s32 %v343
        %v346 = vshll.u32 %v345, 16
        %v347 = vadd.s32 %v346, %v344
        %v348 = vrot.slane %v347, 4
        %v349 = vadd.s32 %v347, %v348
        %v350 = vrot.slane %v349, 2
        %v351 = vadd.s32 %v349, %v350
        %v352 = vrot.slane %v351, 1
        %v353 = vadd.s32 %v351, %v352
        %s354 = vtos %v353
        %s355 = sadd.s32 %s334, %s354
        %s356 = scalar_lea.smem [#allocation7], 2
        %357 = sst [smem:[%s356]] %s355
        %s358 = sld [smem:[#allocation8 + $0x2]]
        %v359 = vsel %vm333, %v277, 0.0
        %360 = vadd.xlane.f32.xlu0 %v359
        %v361 = vpop.xlane.xlu0 %360
        %v362 = vrot.slane %v361, 4
        %v363 = vadd.f32 %v361, %v362
        %v364 = vrot.slane %v363, 2
        %v365 = vadd.f32 %v363, %v364
        %v366 = vrot.slane %v365, 1
        %v367 = vadd.f32 %v365, %v366
        %s368 = vtos %v367
        %s369 = sadd.f32 %s358, %s368
        %s370 = scalar_lea.smem [#allocation8], 2
        %371 = sst [smem:[%s370]] %s369
        %vm372 = vcmp.ge.f32.partialorder %v280, 3.0
        %s373 = sld [smem:[#allocation7 + $0x3]]
        %v374 = vsel %vm372, 1, 0
        %v375 = vand.u32 %v374, 65535
        %v376 = vshrl.u32 %v374, 16
        %v377 = vcvt.s32.f32 %v375
        %v378 = vcvt.s32.f32 %v376
        %379 = vadd.xlane.f32.xlu0 %v377
        %v380 = vpop.xlane.xlu0 %379
        %381 = vadd.xlane.f32.xlu0 %v378
        %v382 = vpop.xlane.xlu0 %381
        %v383 = vcvt.f32.s32 %v380
        %v384 = vcvt.f32.s32 %v382
        %v385 = vshll.u32 %v384, 16
        %v386 = vadd.s32 %v385, %v383
        %v387 = vrot.slane %v386, 4
        %v388 = vadd.s32 %v386, %v387
        %v389 = vrot.slane %v388, 2
        %v390 = vadd.s32 %v388, %v389
        %v391 = vrot.slane %v390, 1
        %v392 = vadd.s32 %v390, %v391
        %s393 = vtos %v392
        %s394 = sadd.s32 %s373, %s393
        %s395 = scalar_lea.smem [#allocation7], 3
        %396 = sst [smem:[%s395]] %s394
        %s397 = sld [smem:[#allocation8 + $0x3]]
        %v398 = vsel %vm372, %v277, 0.0
        %399 = vadd.xlane.f32.xlu0 %v398
        %v400 = vpop.xlane.xlu0 %399
        %v401 = vrot.slane %v400, 4
        %v402 = vadd.f32 %v400, %v401
        %v403 = vrot.slane %v402, 2
        %v404 = vadd.f32 %v402, %v403
        %v405 = vrot.slane %v404, 1
        %v406 = vadd.f32 %v404, %v405
        %s407 = vtos %v406
        %s408 = sadd.f32 %s397, %s407
        %s409 = scalar_lea.smem [#allocation8], 3
        %410 = sst [smem:[%s409]] %s408
        %vm411 = vcmp.ge.f32.partialorder %v280, 4.0
        %s412 = sld [smem:[#allocation7 + $0x4]]
        %v413 = vsel %vm411, 1, 0
        %v414 = vand.u32 %v413, 65535
        %v415 = vshrl.u32 %v413, 16
        %v416 = vcvt.s32.f32 %v414
        %v417 = vcvt.s32.f32 %v415
        %418 = vadd.xlane.f32.xlu0 %v416
        %v419 = vpop.xlane.xlu0 %418
        %420 = vadd.xlane.f32.xlu0 %v417
        %v421 = vpop.xlane.xlu0 %420
        %v422 = vcvt.f32.s32 %v419
        %v423 = vcvt.f32.s32 %v421
        %v424 = vshll.u32 %v423, 16
        %v425 = vadd.s32 %v424, %v422
        %v426 = vrot.slane %v425, 4
        %v427 = vadd.s32 %v425, %v426
        %v428 = vrot.slane %v427, 2
        %v429 = vadd.s32 %v427, %v428
        %v430 = vrot.slane %v429, 1
        %v431 = vadd.s32 %v429, %v430
        %s432 = vtos %v431
        %s433 = sadd.s32 %s412, %s432
        %s434 = scalar_lea.smem [#allocation7], 4
        %435 = sst [smem:[%s434]] %s433
        %s436 = sld [smem:[#allocation8 + $0x4]]
        %v437 = vsel %vm411, %v277, 0.0
        %438 = vadd.xlane.f32.xlu0 %v437
        %v439 = vpop.xlane.xlu0 %438
        %v440 = vrot.slane %v439, 4
        %v441 = vadd.f32 %v439, %v440
        %v442 = vrot.slane %v441, 2
        %v443 = vadd.f32 %v441, %v442
        %v444 = vrot.slane %v443, 1
        %v445 = vadd.f32 %v443, %v444
        %s446 = vtos %v445
        %s447 = sadd.f32 %s436, %s446
        %s448 = scalar_lea.smem [#allocation8], 4
        %449 = sst [smem:[%s448]] %s447
        %vm450 = vcmp.ge.f32.partialorder %v280, 5.0
        %s451 = sld [smem:[#allocation7 + $0x5]]
        %v452 = vsel %vm450, 1, 0
        %v453 = vand.u32 %v452, 65535
        %v454 = vshrl.u32 %v452, 16
        %v455 = vcvt.s32.f32 %v453
        %v456 = vcvt.s32.f32 %v454
        %457 = vadd.xlane.f32.xlu0 %v455
        %v458 = vpop.xlane.xlu0 %457
        %459 = vadd.xlane.f32.xlu0 %v456
        %v460 = vpop.xlane.xlu0 %459
        %v461 = vcvt.f32.s32 %v458
        %v462 = vcvt.f32.s32 %v460
        %v463 = vshll.u32 %v462, 16
        %v464 = vadd.s32 %v463, %v461
        %v465 = vrot.slane %v464, 4
        %v466 = vadd.s32 %v464, %v465
        %v467 = vrot.slane %v466, 2
        %v468 = vadd.s32 %v466, %v467
        %v469 = vrot.slane %v468, 1
        %v470 = vadd.s32 %v468, %v469
        %s471 = vtos %v470
        %s472 = sadd.s32 %s451, %s471
        %s473 = scalar_lea.smem [#allocation7], 5
        %474 = sst [smem:[%s473]] %s472
        %s475 = sld [smem:[#allocation8 + $0x5]]
        %v476 = vsel %vm450, %v277, 0.0
        %477 = vadd.xlane.f32.xlu0 %v476
        %v478 = vpop.xlane.xlu0 %477
        %v479 = vrot.slane %v478, 4
        %v480 = vadd.f32 %v478, %v479
        %v481 = vrot.slane %v480, 2
        %v482 = vadd.f32 %v480, %v481
        %v483 = vrot.slane %v482, 1
        %v484 = vadd.f32 %v482, %v483
        %s485 = vtos %v484
        %s486 = sadd.f32 %s475, %s485
        %s487 = scalar_lea.smem [#allocation8], 5
        %488 = sst [smem:[%s487]] %s486
        %vm489 = vcmp.ge.f32.partialorder %v280, 6.0
        %s490 = sld [smem:[#allocation7 + $0x6]]
        %v491 = vsel %vm489, 1, 0
        %v492 = vand.u32 %v491, 65535
        %v493 = vshrl.u32 %v491, 16
        %v494 = vcvt.s32.f32 %v492
        %v495 = vcvt.s32.f32 %v493
        %496 = vadd.xlane.f32.xlu0 %v494
        %v497 = vpop.xlane.xlu0 %496
        %498 = vadd.xlane.f32.xlu0 %v495
        %v499 = vpop.xlane.xlu0 %498
        %v500 = vcvt.f32.s32 %v497
        %v501 = vcvt.f32.s32 %v499
        %v502 = vshll.u32 %v501, 16
        %v503 = vadd.s32 %v502, %v500
        %v504 = vrot.slane %v503, 4
        %v505 = vadd.s32 %v503, %v504
        %v506 = vrot.slane %v505, 2
        %v507 = vadd.s32 %v505, %v506
        %v508 = vrot.slane %v507, 1
        %v509 = vadd.s32 %v507, %v508
        %s510 = vtos %v509
        %s511 = sadd.s32 %s490, %s510
        %s512 = scalar_lea.smem [#allocation7], 6
        %513 = sst [smem:[%s512]] %s511
        %s514 = sld [smem:[#allocation8 + $0x6]]
        %v515 = vsel %vm489, %v277, 0.0
        %516 = vadd.xlane.f32.xlu0 %v515
        %v517 = vpop.xlane.xlu0 %516
        %v518 = vrot.slane %v517, 4
        %v519 = vadd.f32 %v517, %v518
        %v520 = vrot.slane %v519, 2
        %v521 = vadd.f32 %v519, %v520
        %v522 = vrot.slane %v521, 1
        %v523 = vadd.f32 %v521, %v522
        %s524 = vtos %v523
        %s525 = sadd.f32 %s514, %s524
        %s526 = scalar_lea.smem [#allocation8], 6
        %527 = sst [smem:[%s526]] %s525
        %vm528 = vcmp.ge.f32.partialorder %v280, 7.0
        %s529 = sld [smem:[#allocation7 + $0x7]]
        %v530 = vsel %vm528, 1, 0
        %v531 = vand.u32 %v530, 65535
        %v532 = vshrl.u32 %v530, 16
        %v533 = vcvt.s32.f32 %v531
        %v534 = vcvt.s32.f32 %v532
        %535 = vadd.xlane.f32.xlu0 %v533
        %v536 = vpop.xlane.xlu0 %535
        %537 = vadd.xlane.f32.xlu0 %v534
        %v538 = vpop.xlane.xlu0 %537
        %v539 = vcvt.f32.s32 %v536
        %v540 = vcvt.f32.s32 %v538
        %v541 = vshll.u32 %v540, 16
        %v542 = vadd.s32 %v541, %v539
        %v543 = vrot.slane %v542, 4
        %v544 = vadd.s32 %v542, %v543
        %v545 = vrot.slane %v544, 2
        %v546 = vadd.s32 %v544, %v545
        %v547 = vrot.slane %v546, 1
        %v548 = vadd.s32 %v546, %v547
        %s549 = vtos %v548
        %s550 = sadd.s32 %s529, %s549
        %s551 = scalar_lea.smem [#allocation7], 7
        %552 = sst [smem:[%s551]] %s550
        %s553 = sld [smem:[#allocation8 + $0x7]]
        %v554 = vsel %vm528, %v277, 0.0
        %555 = vadd.xlane.f32.xlu0 %v554
        %v556 = vpop.xlane.xlu0 %555
        %v557 = vrot.slane %v556, 4
        %v558 = vadd.f32 %v556, %v557
        %v559 = vrot.slane %v558, 2
        %v560 = vadd.f32 %v558, %v559
        %v561 = vrot.slane %v560, 1
        %v562 = vadd.f32 %v560, %v561
        %s563 = vtos %v562
        %s564 = sadd.f32 %s553, %s563
        %s565 = scalar_lea.smem [#allocation8], 7
        %566 = sst [smem:[%s565]] %s564
        %vm567 = vcmp.ge.f32.partialorder %v280, 8.0
        %s568 = sld [smem:[#allocation7 + $0x8]]
        %v569 = vsel %vm567, 1, 0
        %v570 = vand.u32 %v569, 65535
        %v571 = vshrl.u32 %v569, 16
        %v572 = vcvt.s32.f32 %v570
        %v573 = vcvt.s32.f32 %v571
        %574 = vadd.xlane.f32.xlu0 %v572
        %v575 = vpop.xlane.xlu0 %574
        %576 = vadd.xlane.f32.xlu0 %v573
        %v577 = vpop.xlane.xlu0 %576
        %v578 = vcvt.f32.s32 %v575
        %v579 = vcvt.f32.s32 %v577
        %v580 = vshll.u32 %v579, 16
        %v581 = vadd.s32 %v580, %v578
        %v582 = vrot.slane %v581, 4
        %v583 = vadd.s32 %v581, %v582
        %v584 = vrot.slane %v583, 2
        %v585 = vadd.s32 %v583, %v584
        %v586 = vrot.slane %v585, 1
        %v587 = vadd.s32 %v585, %v586
        %s588 = vtos %v587
        %s589 = sadd.s32 %s568, %s588
        %s590 = scalar_lea.smem [#allocation7], 8
        %591 = sst [smem:[%s590]] %s589
        %s592 = sld [smem:[#allocation8 + $0x8]]
        %v593 = vsel %vm567, %v277, 0.0
        %594 = vadd.xlane.f32.xlu0 %v593
        %v595 = vpop.xlane.xlu0 %594
        %v596 = vrot.slane %v595, 4
        %v597 = vadd.f32 %v595, %v596
        %v598 = vrot.slane %v597, 2
        %v599 = vadd.f32 %v597, %v598
        %v600 = vrot.slane %v599, 1
        %v601 = vadd.f32 %v599, %v600
        %s602 = vtos %v601
        %s603 = sadd.f32 %s592, %s602
        %s604 = scalar_lea.smem [#allocation8], 8
        %605 = sst [smem:[%s604]] %s603
        %vm606 = vcmp.ge.f32.partialorder %v280, 9.0
        %s607 = sld [smem:[#allocation7 + $0x9]]
        %v608 = vsel %vm606, 1, 0
        %v609 = vand.u32 %v608, 65535
        %v610 = vshrl.u32 %v608, 16
        %v611 = vcvt.s32.f32 %v609
        %v612 = vcvt.s32.f32 %v610
        %613 = vadd.xlane.f32.xlu0 %v611
        %v614 = vpop.xlane.xlu0 %613
        %615 = vadd.xlane.f32.xlu0 %v612
        %v616 = vpop.xlane.xlu0 %615
        %v617 = vcvt.f32.s32 %v614
        %v618 = vcvt.f32.s32 %v616
        %v619 = vshll.u32 %v618, 16
        %v620 = vadd.s32 %v619, %v617
        %v621 = vrot.slane %v620, 4
        %v622 = vadd.s32 %v620, %v621
        %v623 = vrot.slane %v622, 2
        %v624 = vadd.s32 %v622, %v623
        %v625 = vrot.slane %v624, 1
        %v626 = vadd.s32 %v624, %v625
        %s627 = vtos %v626
        %s628 = sadd.s32 %s607, %s627
        %s629 = scalar_lea.smem [#allocation7], 9
        %630 = sst [smem:[%s629]] %s628
        %s631 = sld [smem:[#allocation8 + $0x9]]
        %v632 = vsel %vm606, %v277, 0.0
        %633 = vadd.xlane.f32.xlu0 %v632
        %v634 = vpop.xlane.xlu0 %633
        %v635 = vrot.slane %v634, 4
        %v636 = vadd.f32 %v634, %v635
        %v637 = vrot.slane %v636, 2
        %v638 = vadd.f32 %v636, %v637
        %v639 = vrot.slane %v638, 1
        %v640 = vadd.f32 %v638, %v639
        %s641 = vtos %v640
        %s642 = sadd.f32 %s631, %s641
        %s643 = scalar_lea.smem [#allocation8], 9
        %644 = sst [smem:[%s643]] %s642
        // Predicated region
        $region41: #{ghm_forward.1} parent=27 // pred_check
          %p645 = pneg %p88
        $region42: #{ghm_forward.1} parent=27 // pred_check_branch
          %647 = sbr.rel (%p645) target = $region44
        $region43: #{ghm_forward.1} parent=27 // pred_region
          %s649 = ssub.s32 16, 16
          %650 = vsyncadd [#allocation4], %s649
          %s652 = sshll.u32 %s2, 4
          %s653 = int_to_ptr.vmem [resolvable:$true] %s652
          %655 = dma.smem_to_vmem [#allocation7], 16, %s653, [#allocation4]
        $region44: #{ghm_forward.1} parent=27 // pred_fallthru
          _
        // Predicated region
        $region45: #{ghm_forward.1} parent=27 // pred_check
          %p656 = pneg %p109
        $region46: #{ghm_forward.1} parent=27 // pred_check_branch
          %658 = sbr.rel (%p656) target = $region48
        $region47: #{ghm_forward.1} parent=27 // pred_region
          %s660 = ssub.s32 16, 16
          %661 = vsyncadd [#allocation9], %s660
          %s663 = sshll.u32 %s3, 4
          %s664 = int_to_ptr.vmem [resolvable:$true] %s663
          %666 = dma.smem_to_vmem [#allocation8], 16, %s664, [#allocation9]
        $region48: #{ghm_forward.1} parent=27 // pred_fallthru
          _
        // Predicated region
        $region49: #{ghm_forward.1} parent=27 // pred_check
          %p667 = pneg %p88
        $region50: #{ghm_forward.1} parent=27 // pred_check_branch
          %669 = sbr.rel (%p667) target = $region52
        $region51: #{ghm_forward.1} parent=27 // pred_region
          %670 = dma.done [#allocation4], 16
        $region52: #{ghm_forward.1} parent=27 // pred_fallthru
          _
        // Predicated region
        $region53: #{ghm_forward.1} parent=27 // pred_check
          %p671 = pneg %p109
        $region54: #{ghm_forward.1} parent=27 // pred_check_branch
          %673 = sbr.rel (%p671) target = $region56
        $region55: #{ghm_forward.1} parent=27 // pred_region
          %674 = dma.done [#allocation9], 16
        $region56: #{ghm_forward.1} parent=27 // pred_fallthru
          _
        %675 = sfence
      $region28: #{ghm_forward.1} parent=5 // pred_fallthru
        _
      %p676 = scmp.le.s32.totalorder 2, %s18
      // Predicated region
      $region57: #{ghm_forward.1} parent=5 // pred_check
        %p677 = pneg %p676
      $region58: #{ghm_forward.1} parent=5 // pred_check_branch
        %679 = sbr.rel (%p677) target = $region60
      $region59: #{ghm_forward.1} parent=5 // pred_region
        %s680 = ssub.s32 %s18, 2
      $region60: #{ghm_forward.1} parent=5 // pred_fallthru
        _
    $region6: #{ghm_forward.1} parent=1 // loop_footer
      %s22 = sadd.s32 1, %s18
    $region7: #{ghm_forward.1} parent=1 // loop_footer_branch
      %17 = sbr.rel target = $region3
    $region8: #{ghm_forward.1} parent=1 // loop_exit
      _
    %681 = vsyncpa [#allocation3], 1
    %s682 = scalar_lea.sflag [#allocation3], 1
    %683 = vsyncpa %s682, 1
    %684 = vsyncpa [#allocation6], 1
    %s685 = scalar_lea.sflag [#allocation6], 1
    %686 = vsyncpa %s685, 1
    %687 = vsyncpa [#allocation4], 1
    %s688 = scalar_lea.sflag [#allocation4], 1
    %689 = vsyncpa %s688, 1
    %690 = vsyncpa [#allocation9], 1

</llo_original>
